<compile_context>
chip_gen: v7x
topology: tpu7x:2x2x1
jax: 0.10.0
libtpu: 0.0.40
codegen_flags: <defaults>
</compile_context>

<pallas_src>
import jax
import jax.numpy as jnp
from jax.experimental import pallas as pl
from jax.experimental.pallas import tpu as pltpu

NEG_SLOPE = 0.2          # LeakyReLU negative slope from the PyTorch module
_LANE = 128              # TPU lane width
_SUBLANE_BF16 = 16       # bf16 sublane packing


def _round_up(n, m):
    return ((n + m - 1) // m) * m


def discriminator_kernel(x_ref, w0_ref, b0_ref, w1_ref, b1_ref, w2_ref, b2_ref,
                         out_ref):
    x = x_ref[...]                                                    # (TM, D) bf16

    # linear_0 + LeakyReLU   (dropout_0 = identity in eval mode)
    h = jnp.dot(x, w0_ref[...], preferred_element_type=jnp.float32) + b0_ref[...]
    h = jnp.maximum(h, NEG_SLOPE * h)                                 # f32 VPU
    h = h.astype(w1_ref.dtype)                                        # -> bf16 for MXU

    # linear_1 + LeakyReLU   (dropout_1 = identity in eval mode)
    h = jnp.dot(h, w1_ref[...], preferred_element_type=jnp.float32) + b1_ref[...]
    h = jnp.maximum(h, NEG_SLOPE * h)
    h = h.astype(w2_ref.dtype)

    # pred  (output feature dim zero-padded to a full 128-lane block)
    out = jnp.dot(h, w2_ref[...], preferred_element_type=jnp.float32) + b2_ref[...]
    out_ref[...] = out.astype(out_ref.dtype)


def prepare_discriminator_params(w0, b0, w1, b1, w2, b2,
                                 compute_dtype=jnp.bfloat16):
    """One-time layout plumbing (call once when params are created/loaded).

    Transposes PyTorch (out, in) weights to (in, out), zero-pads the output
    feature dim to a multiple of 128 lanes, casts matmul operands to bf16 and
    keeps biases in f32 (added after the f32 accumulation).
    """
    H, D = w0.shape
    A = w2.shape[0]
    A_pad = _round_up(A, _LANE)

    w0t = jnp.asarray(w0, jnp.float32).T.astype(compute_dtype)            # (D, H)
    w1t = jnp.asarray(w1, jnp.float32).T.astype(compute_dtype)            # (H, H)
    w2t = jnp.zeros((H, A_pad), compute_dtype).at[:, :A].set(
        jnp.asarray(w2, jnp.float32).T.astype(compute_dtype))             # (H, A_pad)

    b0r = jnp.asarray(b0, jnp.float32).reshape(1, H)
    b1r = jnp.asarray(b1, jnp.float32).reshape(1, H)
    b2r = jnp.zeros((1, A_pad), jnp.float32).at[:, :A].set(
        jnp.asarray(b2, jnp.float32).reshape(1, A))

    return {"w0t": w0t, "b0": b0r, "w1t": w1t, "b1": b1r,
            "w2t": w2t, "b2": b2r, "A": A}


def _choose_tiling(B):
    """Pick (B_padded, TM) so every block is full (no ragged masked stores)
    and larger batches keep >= 2 parallel blocks (v7x has 2 TensorCores)."""
    if B <= 128:
        TM = _round_up(B, _SUBLANE_BF16)
        return TM, TM
    if B <= 512:
        TM = _round_up((B + 1) // 2, _LANE)      # two blocks of >=128 rows
        return 2 * TM, TM
    TM = 256                                     # MXU-friendly big tiles
    return _round_up(B, TM), TM


def discriminator_forward(x, params):
    """Pallas equivalent of Discriminator.forward() in eval mode.

    x: (B, D) array; params from prepare_discriminator_params().
    Returns (B, n_atlas) float32 logits.
    """
    w0t, b0 = params["w0t"], params["b0"]
    w1t, b1 = params["w1t"], params["b1"]
    w2t, b2 = params["w2t"], params["b2"]
    A = params["A"]

    B, D = x.shape
    H = w0t.shape[1]
    A_pad = w2t.shape[1]

    B_pad, TM = _choose_tiling(B)
    xp = jnp.asarray(x, jnp.float32).astype(w0t.dtype)                # bf16 stream
    if B_pad != B:
        xp = jnp.pad(xp, ((0, B_pad - B), (0, 0)))

    grid = (B_pad // TM,)

    def _nbytes(a):
        return a.size * a.dtype.itemsize

    cost = pl.CostEstimate(
        flops=2 * B_pad * (D * H + H * H + H * A_pad),
        transcendentals=0,
        bytes_accessed=(_nbytes(xp) + _nbytes(w0t) + _nbytes(w1t) + _nbytes(w2t)
                        + _nbytes(b0) + _nbytes(b1) + _nbytes(b2)
                        + B_pad * A_pad * 4),
    )

    out = pl.pallas_call(
        discriminator_kernel,
        out_shape=jax.ShapeDtypeStruct((B_pad, A_pad), jnp.float32),
        grid=grid,
        in_specs=[
            pl.BlockSpec((TM, D), lambda i: (i, 0)),       # x row block (streamed)
            pl.BlockSpec((D, H), lambda i: (0, 0)),        # w0^T (resident)
            pl.BlockSpec((1, H), lambda i: (0, 0)),        # b0
            pl.BlockSpec((H, H), lambda i: (0, 0)),        # w1^T (resident)
            pl.BlockSpec((1, H), lambda i: (0, 0)),        # b1
            pl.BlockSpec((H, A_pad), lambda i: (0, 0)),    # w2^T (resident, padded)
            pl.BlockSpec((1, A_pad), lambda i: (0, 0)),    # b2 (padded)
        ],
        out_specs=pl.BlockSpec((TM, A_pad), lambda i: (i, 0)),
        compiler_params=pltpu.CompilerParams(
            dimension_semantics=("parallel",)),
        cost_estimate=cost,
    )(xp, w0t, b0, w1t, b1, w2t, b2)

    return out[:B, :A]


def _reference_forward(x, w0, b0, w1, b1, w2, b2):
    """Pure-JAX f32 reference (eval mode: dropout is identity)."""
    h = x @ w0.T + b0
    h = jnp.where(h > 0, h, NEG_SLOPE * h)
    h = h @ w1.T + b1
    h = jnp.where(h > 0, h, NEG_SLOPE * h)
    return h @ w2.T + b2


if __name__ == "__main__":
    # Shapes consistent with the module: latent_dim=128, hidden=256 (fixed by
    # the module), n_atlas=16, batch=16.
    B, D, H, A = 16, 128, 256, 16

    key = jax.random.PRNGKey(0)
    kx, k0, k1, k2, kb0, kb1, kb2 = jax.random.split(key, 7)

    # PyTorch nn.Linear default init: U(-1/sqrt(fan_in), 1/sqrt(fan_in))
    def linear_init(kw, kb, fan_out, fan_in):
        bound = 1.0 / (fan_in ** 0.5)
        w = jax.random.uniform(kw, (fan_out, fan_in), jnp.float32, -bound, bound)
        b = jax.random.uniform(kb, (fan_out,), jnp.float32, -bound, bound)
        return w, b

    x = jax.random.normal(kx, (B, D), jnp.float32)
    w0, b0 = linear_init(k0, kb0, H, D)
    w1, b1 = linear_init(k1, kb1, H, H)
    w2, b2 = linear_init(k2, kb2, A, H)

    params = prepare_discriminator_params(w0, b0, w1, b1, w2, b2)  # once

    out = jax.block_until_ready(discriminator_forward(x, params))
    ref = jax.block_until_ready(_reference_forward(x, w0, b0, w1, b1, w2, b2))

    assert out.shape == (B, A), f"bad output shape {out.shape}"
    max_err = float(jnp.max(jnp.abs(out - ref)))
    # bf16 operands with f32 accumulation -> small drift vs pure-f32 reference
    assert max_err < 2e-2, f"mismatch vs reference: {max_err}"

    print("KERNEL_OK")
</pallas_src>

<mosaic_0001>
module attributes {stable_mosaic.version = 11 : i64} {
  func.func @discriminator_kernel(%arg0: i32, %arg1: memref<16x128xbf16, #tpu.memory_space<vmem>>, %arg2: memref<128x256xbf16, #tpu.memory_space<vmem>>, %arg3: memref<1x256xf32, #tpu.memory_space<vmem>>, %arg4: memref<256x256xbf16, #tpu.memory_space<vmem>>, %arg5: memref<1x256xf32, #tpu.memory_space<vmem>>, %arg6: memref<256x128xbf16, #tpu.memory_space<vmem>>, %arg7: memref<1x128xf32, #tpu.memory_space<vmem>>, %arg8: memref<16x128xf32, #tpu.memory_space<vmem>>) attributes {dimension_semantics = [#tpu.dimension_semantics<parallel>], iteration_bounds = array<i64: 1>, scalar_prefetch = 0 : i64, scratch_operands = 0 : i64, tpu.core_type = #tpu.core_type<tc>, window_params = [{transform_indices = @transform_0, window_bounds = array<i64: 16, 128>}, {pipeline_mode = #tpu.pipeline_mode<synchronous>, transform_indices = @transform_1, window_bounds = array<i64: 128, 256>}, {pipeline_mode = #tpu.pipeline_mode<synchronous>, transform_indices = @transform_2, window_bounds = array<i64: 1, 256>}, {pipeline_mode = #tpu.pipeline_mode<synchronous>, transform_indices = @transform_3, window_bounds = array<i64: 256, 256>}, {pipeline_mode = #tpu.pipeline_mode<synchronous>, transform_indices = @transform_4, window_bounds = array<i64: 1, 256>}, {pipeline_mode = #tpu.pipeline_mode<synchronous>, transform_indices = @transform_5, window_bounds = array<i64: 256, 128>}, {pipeline_mode = #tpu.pipeline_mode<synchronous>, transform_indices = @transform_6, window_bounds = array<i64: 1, 128>}, {transform_indices = @transform_7, window_bounds = array<i64: 16, 128>}]} {
    %c0 = arith.constant 0 : index
    %c0_0 = arith.constant 0 : index
    %0 = vector.load %arg1[%c0, %c0_0] : memref<16x128xbf16, #tpu.memory_space<vmem>>, vector<16x128xbf16>
    %c0_1 = arith.constant 0 : index
    %c0_2 = arith.constant 0 : index
    %1 = vector.load %arg2[%c0_1, %c0_2] : memref<128x256xbf16, #tpu.memory_space<vmem>>, vector<128x256xbf16>
    %cst = arith.constant dense<0.000000e+00> : vector<16x256xf32>
    %2 = tpu.matmul %0, %1, %cst {dimension_numbers = #tpu.dot_dimension_numbers<[1], [0], [0], [1], [0, 0, 1, 1], [], []>} : vector<16x128xbf16>, vector<128x256xbf16>, vector<16x256xf32> -> vector<16x256xf32>
    %c0_3 = arith.constant 0 : index
    %c0_4 = arith.constant 0 : index
    %3 = vector.load %arg3[%c0_3, %c0_4] : memref<1x256xf32, #tpu.memory_space<vmem>>, vector<1x256xf32>
    %4 = vector.broadcast %3 : vector<1x256xf32> to vector<16x256xf32>
    %5 = arith.addf %2, %4 : vector<16x256xf32>
    %cst_5 = arith.constant 2.000000e-01 : f32
    %6 = vector.broadcast %cst_5 : f32 to vector<16x256xf32>
    %7 = arith.mulf %6, %5 : vector<16x256xf32>
    %8 = arith.maximumf %5, %7 : vector<16x256xf32>
    %9 = arith.truncf %8 : vector<16x256xf32> to vector<16x256xbf16>
    %c0_6 = arith.constant 0 : index
    %c0_7 = arith.constant 0 : index
    %10 = vector.load %arg4[%c0_6, %c0_7] : memref<256x256xbf16, #tpu.memory_space<vmem>>, vector<256x256xbf16>
    %cst_8 = arith.constant dense<0.000000e+00> : vector<16x256xf32>
    %11 = tpu.matmul %9, %10, %cst_8 {dimension_numbers = #tpu.dot_dimension_numbers<[1], [0], [0], [1], [0, 0, 1, 1], [], []>} : vector<16x256xbf16>, vector<256x256xbf16>, vector<16x256xf32> -> vector<16x256xf32>
    %c0_9 = arith.constant 0 : index
    %c0_10 = arith.constant 0 : index
    %12 = vector.load %arg5[%c0_9, %c0_10] : memref<1x256xf32, #tpu.memory_space<vmem>>, vector<1x256xf32>
    %13 = vector.broadcast %12 : vector<1x256xf32> to vector<16x256xf32>
    %14 = arith.addf %11, %13 : vector<16x256xf32>
    %cst_11 = arith.constant 2.000000e-01 : f32
    %15 = vector.broadcast %cst_11 : f32 to vector<16x256xf32>
    %16 = arith.mulf %15, %14 : vector<16x256xf32>
    %17 = arith.maximumf %14, %16 : vector<16x256xf32>
    %18 = arith.truncf %17 : vector<16x256xf32> to vector<16x256xbf16>
    %c0_12 = arith.constant 0 : index
    %c0_13 = arith.constant 0 : index
    %19 = vector.load %arg6[%c0_12, %c0_13] : memref<256x128xbf16, #tpu.memory_space<vmem>>, vector<256x128xbf16>
    %cst_14 = arith.constant dense<0.000000e+00> : vector<16x128xf32>
    %20 = tpu.matmul %18, %19, %cst_14 {dimension_numbers = #tpu.dot_dimension_numbers<[1], [0], [0], [1], [0, 0, 1, 1], [], []>} : vector<16x256xbf16>, vector<256x128xbf16>, vector<16x128xf32> -> vector<16x128xf32>
    %c0_15 = arith.constant 0 : index
    %c0_16 = arith.constant 0 : index
    %21 = vector.load %arg7[%c0_15, %c0_16] : memref<1x128xf32, #tpu.memory_space<vmem>>, vector<1x128xf32>
    %22 = vector.broadcast %21 : vector<1x128xf32> to vector<16x128xf32>
    %23 = arith.addf %20, %22 : vector<16x128xf32>
    %c0_17 = arith.constant 0 : index
    %c0_18 = arith.constant 0 : index
    %24 = vector.load %arg8[%c0_17, %c0_18] : memref<16x128xf32, #tpu.memory_space<vmem>>, vector<16x128xf32>
    tpu.vector_store %arg8[%c0_17, %c0_18], %23 {strides = array<i32>} : memref<16x128xf32, #tpu.memory_space<vmem>>, vector<16x128xf32>,
    return
  }
  func.func @transform_0(%arg0: i32) -> (i32, i32) {
    %c0_i32 = arith.constant 0 : i32
    %c0_i32_0 = arith.constant 0 : i32
    return %arg0, %c0_i32 : i32, i32
  }
  func.func @transform_1(%arg0: i32) -> (i32, i32) {
    %c0_i32 = arith.constant 0 : i32
    %c0_i32_0 = arith.constant 0 : i32
    %c0_i32_1 = arith.constant 0 : i32
    return %c0_i32, %c0_i32_0 : i32, i32
  }
  func.func @transform_2(%arg0: i32) -> (i32, i32) {
    %c0_i32 = arith.constant 0 : i32
    %c0_i32_0 = arith.constant 0 : i32
    %c0_i32_1 = arith.constant 0 : i32
    return %c0_i32, %c0_i32_0 : i32, i32
  }
  func.func @transform_3(%arg0: i32) -> (i32, i32) {
    %c0_i32 = arith.constant 0 : i32
    %c0_i32_0 = arith.constant 0 : i32
    %c0_i32_1 = arith.constant 0 : i32
    return %c0_i32, %c0_i32_0 : i32, i32
  }
  func.func @transform_4(%arg0: i32) -> (i32, i32) {
    %c0_i32 = arith.constant 0 : i32
    %c0_i32_0 = arith.constant 0 : i32
    %c0_i32_1 = arith.constant 0 : i32
    return %c0_i32, %c0_i32_0 : i32, i32
  }
  func.func @transform_5(%arg0: i32) -> (i32, i32) {
    %c0_i32 = arith.constant 0 : i32
    %c0_i32_0 = arith.constant 0 : i32
    %c0_i32_1 = arith.constant 0 : i32
    return %c0_i32, %c0_i32_0 : i32, i32
  }
  func.func @transform_6(%arg0: i32) -> (i32, i32) {
    %c0_i32 = arith.constant 0 : i32
    %c0_i32_0 = arith.constant 0 : i32
    %c0_i32_1 = arith.constant 0 : i32
    return %c0_i32, %c0_i32_0 : i32, i32
  }
  func.func @transform_7(%arg0: i32) -> (i32, i32) {
    %c0_i32 = arith.constant 0 : i32
    %c0_i32_0 = arith.constant 0 : i32
    return %arg0, %c0_i32 : i32, i32
  }
}

</mosaic_0001>

<llo_original>
// kernel: tpu_custom_call.1
$region0: #{tpu_custom_call.1}
  #allocation0 [shape = 'u32[]', space=smem, size = 0x4, offset = 0x4, fixed_abs, tag = 'smem constant byte address 0x4 - core index']
  #allocation1 [shape = 'u32[144,128]{1,0:T(1,128)}', space=vmem, size = 0x12000, scoped, tag = 'internal scratch']
  %s0 = inlined_call_operand.hbm [shape: bf16[16,128], index: 0, kind: input, shape index: {}]
  %s1 = inlined_call_operand.hbm [shape: bf16[128,256], index: 1, kind: input, shape index: {}]
  %s2 = inlined_call_operand.vmem [shape: f32[1,256], index: 2, kind: input, shape index: {}]
  %s3 = inlined_call_operand.hbm [shape: bf16[256,256], index: 3, kind: input, shape index: {}]
  %s4 = inlined_call_operand.vmem [shape: f32[1,256], index: 4, kind: input, shape index: {}]
  %s5 = inlined_call_operand.hbm [shape: bf16[256,128], index: 5, kind: input, shape index: {}]
  %s6 = inlined_call_operand.vmem [shape: f32[1,128], index: 6, kind: input, shape index: {}]
  %s7 = inlined_call_operand.hbm [shape: f32[16,128], index: 7, kind: output, shape index: {}]
  %s8 = sld [smem:[#allocation0]]
  $region54: #{tpu_custom_call.1} parent=0
    _
  %s10 = ssub.s32 1, %s8
  %s11 = scalar_select 0, %s10, %s8
  $region1: #{tpu_custom_call.1} parent=0
    #allocation2 [shape = 'u8[4096]{0}', space=vmem, size = 0x1000, scoped, tag = 'input window, operand 0, single buffered']
    #allocation3 [shape = 's32[1]{0}', space=sflag, size = 0x4, scoped, tag = 'scoped memory for tpu_custom_call.1']
    #allocation4 [shape = 's32[1]{0}', space=sflag, size = 0x4, scoped, tag = 'scoped memory for tpu_custom_call.1']
    #allocation5 [shape = 'u8[65536]{0}', space=vmem, size = 0x10000, scoped, tag = 'input window, operand 1, single buffered']
    #allocation6 [shape = 's32[1]{0}', space=sflag, size = 0x4, scoped, tag = 'scoped memory for tpu_custom_call.1']
    #allocation7 [shape = 'u8[131072]{0}', space=vmem, size = 0x20000, scoped, tag = 'input window, operand 3, single buffered']
    #allocation8 [shape = 'u8[65536]{0}', space=vmem, size = 0x10000, scoped, tag = 'input window, operand 5, single buffered']
    #allocation9 [shape = 's32[1]{0}', space=sflag, size = 0x4, scoped, tag = 'scoped memory for tpu_custom_call.1']
    #allocation10 [shape = 'u8[8192]{0}', space=vmem, size = 0x2000, scoped, tag = 'output window, operand 0, single buffered']
    %12 = vsyncpa [#allocation3], 0
    %13 = vsyncpa [#allocation6], 0
    %14 = vsyncpa [#allocation9], 0
    %15 = vsyncpa [#allocation4], 0
    // Predicated region
    $region2: #{tpu_custom_call.1} parent=1 // pred_check
      _
    $region3: #{tpu_custom_call.1} parent=1 // pred_check_branch
      %17 = sbr.rel (0) target = $region5
    $region4: #{tpu_custom_call.1} parent=1 // pred_region
      %s19 = ssub.s32 128, 128
      %20 = vsyncadd [#allocation3], %s19
      %s21 = sshll.u32 [#allocation2], 4
      %s22 = int_to_ptr.vmem [resolvable:$true] %s21
      %27 = dma.hbm_to_vmem [thread:$0]  %s0, 128, %s22, [#allocation3], 64, 64, 4
    $region5: #{tpu_custom_call.1} parent=1 // pred_fallthru
      _
    // Predicated region
    $region6: #{tpu_custom_call.1} parent=1 // pred_check
      _
    $region7: #{tpu_custom_call.1} parent=1 // pred_check_branch
      %29 = sbr.rel (0) target = $region9
    $region8: #{tpu_custom_call.1} parent=1 // pred_region
      %s31 = ssub.s32 2048, 2048
      %32 = vsyncadd [#allocation6], %s31
      %s33 = sshll.u32 [#allocation5], 4
      %s34 = int_to_ptr.vmem [resolvable:$true] %s33
      %39 = dma.hbm_to_vmem [thread:$0]  %s1, 2048, %s34, [#allocation6], 128, 128, 8
    $region9: #{tpu_custom_call.1} parent=1 // pred_fallthru
      _
    // Predicated region
    $region10: #{tpu_custom_call.1} parent=1 // pred_check
      _
    $region11: #{tpu_custom_call.1} parent=1 // pred_check_branch
      %41 = sbr.rel (0) target = $region13
    $region12: #{tpu_custom_call.1} parent=1 // pred_region
      _
    $region13: #{tpu_custom_call.1} parent=1 // pred_fallthru
      _
    // Predicated region
    $region14: #{tpu_custom_call.1} parent=1 // pred_check
      _
    $region15: #{tpu_custom_call.1} parent=1 // pred_check_branch
      %43 = sbr.rel (0) target = $region17
    $region16: #{tpu_custom_call.1} parent=1 // pred_region
      %s45 = ssub.s32 4096, 4096
      %46 = vsyncadd [#allocation6], %s45
      %s47 = sshll.u32 [#allocation7], 4
      %s48 = int_to_ptr.vmem [resolvable:$true] %s47
      %53 = dma.hbm_to_vmem [thread:$0]  %s3, 4096, %s48, [#allocation6], 128, 128, 8
    $region17: #{tpu_custom_call.1} parent=1 // pred_fallthru
      _
    // Predicated region
    $region18: #{tpu_custom_call.1} parent=1 // pred_check
      _
    $region19: #{tpu_custom_call.1} parent=1 // pred_check_branch
      %55 = sbr.rel (0) target = $region21
    $region20: #{tpu_custom_call.1} parent=1 // pred_region
      _
    $region21: #{tpu_custom_call.1} parent=1 // pred_fallthru
      _
    // Predicated region
    $region22: #{tpu_custom_call.1} parent=1 // pred_check
      _
    $region23: #{tpu_custom_call.1} parent=1 // pred_check_branch
      %57 = sbr.rel (0) target = $region25
    $region24: #{tpu_custom_call.1} parent=1 // pred_region
      %s59 = ssub.s32 2048, 2048
      %60 = vsyncadd [#allocation9], %s59
      %s61 = sshll.u32 [#allocation8], 4
      %s62 = int_to_ptr.vmem [resolvable:$true] %s61
      %67 = dma.hbm_to_vmem [thread:$0]  %s5, 2048, %s62, [#allocation9], 64, 64, 4
    $region25: #{tpu_custom_call.1} parent=1 // pred_fallthru
      _
    // Predicated region
    $region26: #{tpu_custom_call.1} parent=1 // pred_check
      _
    $region27: #{tpu_custom_call.1} parent=1 // pred_check_branch
      %69 = sbr.rel (0) target = $region29
    $region28: #{tpu_custom_call.1} parent=1 // pred_region
      _
    $region29: #{tpu_custom_call.1} parent=1 // pred_fallthru
      _
    // Predicated region
    $region30: #{tpu_custom_call.1} parent=1 // pred_check
      _
    $region31: #{tpu_custom_call.1} parent=1 // pred_check_branch
      %71 = sbr.rel (0) target = $region33
    $region32: #{tpu_custom_call.1} parent=1 // pred_region
      %72 = dma.done [#allocation3], 128
    $region33: #{tpu_custom_call.1} parent=1 // pred_fallthru
      _
    // Predicated region
    $region34: #{tpu_custom_call.1} parent=1 // pred_check
      _
    $region35: #{tpu_custom_call.1} parent=1 // pred_check_branch
      %74 = sbr.rel (0) target = $region37
    $region36: #{tpu_custom_call.1} parent=1 // pred_region
      %75 = dma.done [#allocation6], 2048
    $region37: #{tpu_custom_call.1} parent=1 // pred_fallthru
      _
    // Predicated region
    $region38: #{tpu_custom_call.1} parent=1 // pred_check
      _
    $region39: #{tpu_custom_call.1} parent=1 // pred_check_branch
      %77 = sbr.rel (0) target = $region41
    $region40: #{tpu_custom_call.1} parent=1 // pred_region
      %78 = dma.done [#allocation6], 4096
    $region41: #{tpu_custom_call.1} parent=1 // pred_fallthru
      _
    // Predicated region
    $region42: #{tpu_custom_call.1} parent=1 // pred_check
      _
    $region43: #{tpu_custom_call.1} parent=1 // pred_check_branch
      %80 = sbr.rel (0) target = $region45
    $region44: #{tpu_custom_call.1} parent=1 // pred_region
      %81 = dma.done [#allocation9], 2048
    $region45: #{tpu_custom_call.1} parent=1 // pred_fallthru
      _
    %v83 = vld [vmem:[#allocation2] sm:$0xf]
    %v84 = vld [vmem:[#allocation2 + $0x4] sm:$0xf]
    %v85 = vld [vmem:[#allocation5] sm:$0xff]
    %v86 = vld [vmem:[#allocation5 + $0x8] sm:$0xff]
    %v87 = vld [vmem:[#allocation5 + $0x10] sm:$0xff]
    %v88 = vld [vmem:[#allocation5 + $0x18] sm:$0xff]
    %v89 = vld [vmem:[#allocation5 + $0x20] sm:$0xff]
    %v90 = vld [vmem:[#allocation5 + $0x28] sm:$0xff]
    %v91 = vld [vmem:[#allocation5 + $0x30] sm:$0xff]
    %v92 = vld [vmem:[#allocation5 + $0x38] sm:$0xff]
    %v93 = vld [vmem:[#allocation5 + $0x40] sm:$0xff]
    %v94 = vld [vmem:[#allocation5 + $0x48] sm:$0xff]
    %v95 = vld [vmem:[#allocation5 + $0x50] sm:$0xff]
    %v96 = vld [vmem:[#allocation5 + $0x58] sm:$0xff]
    %v97 = vld [vmem:[#allocation5 + $0x60] sm:$0xff]
    %v98 = vld [vmem:[#allocation5 + $0x68] sm:$0xff]
    %v99 = vld [vmem:[#allocation5 + $0x70] sm:$0xff]
    %v100 = vld [vmem:[#allocation5 + $0x78] sm:$0xff]
    %v101 = vld [vmem:[%s2] sm:$0x3]
    %v103 = vlaneseq
    %v104 = vshrl.u32 %v103, 7
    %v105 = vsub.s32 0, %v104
    %v106 = vrot.slane %v101, %v105
    %v107 = vlaneseq
    %v108 = vshrl.u32 %v107, 7
    %v109 = vsub.s32 1, %v108
    %v110 = vrot.slane %v101, %v109
    %v115 = vunpack.c.l.b16 %v83
    %v116 = vunpack.c.l.b16 %v84
    %v117 = vpack.c.b16 %v116, %v115
    %v135 = vunpack.c.l.b16 %v85
    %v136 = vunpack.c.h.b16 %v85
    %v137 = vunpack.c.l.b16 %v86
    %v138 = vunpack.c.h.b16 %v86
    %v139 = vunpack.c.l.b16 %v87
    %v140 = vunpack.c.h.b16 %v87
    %v141 = vunpack.c.l.b16 %v88
    %v142 = vunpack.c.h.b16 %v88
    %v143 = vunpack.c.l.b16 %v89
    %v144 = vunpack.c.h.b16 %v89
    %v145 = vunpack.c.l.b16 %v90
    %v146 = vunpack.c.h.b16 %v90
    %v147 = vunpack.c.l.b16 %v91
    %v148 = vunpack.c.h.b16 %v91
    %v149 = vunpack.c.l.b16 %v92
    %v150 = vunpack.c.h.b16 %v92
    %v151 = vunpack.c.l.b16 %v93
    %v152 = vunpack.c.h.b16 %v93
    %v153 = vunpack.c.l.b16 %v94
    %v154 = vunpack.c.h.b16 %v94
    %v155 = vunpack.c.l.b16 %v95
    %v156 = vunpack.c.h.b16 %v95
    %v157 = vunpack.c.l.b16 %v96
    %v158 = vunpack.c.h.b16 %v96
    %v159 = vunpack.c.l.b16 %v97
    %v160 = vunpack.c.h.b16 %v97
    %v161 = vunpack.c.l.b16 %v98
    %v162 = vunpack.c.h.b16 %v98
    %v163 = vunpack.c.l.b16 %v99
    %v164 = vunpack.c.h.b16 %v99
    %v165 = vunpack.c.l.b16 %v100
    %v166 = vunpack.c.h.b16 %v100
    %v167 = vpack.c.b16 %v137, %v135
    %v168 = vpack.c.b16 %v138, %v136
    %v169 = vpack.c.b16 %v141, %v139
    %v170 = vpack.c.b16 %v142, %v140
    %v171 = vpack.c.b16 %v145, %v143
    %v172 = vpack.c.b16 %v146, %v144
    %v173 = vpack.c.b16 %v149, %v147
    %v174 = vpack.c.b16 %v150, %v148
    %v175 = vpack.c.b16 %v153, %v151
    %v176 = vpack.c.b16 %v154, %v152
    %v177 = vpack.c.b16 %v157, %v155
    %v178 = vpack.c.b16 %v158, %v156
    %v179 = vpack.c.b16 %v161, %v159
    %v180 = vpack.c.b16 %v162, %v160
    %v181 = vpack.c.b16 %v165, %v163
    %v182 = vpack.c.b16 %v166, %v164
    %199 = vmatprep.subr.bf16.mxu0 %v168
    %200 = vmatpush1.bf16.msra.mxu0 %v167
    %201 = vmatprep.subr.bf16.mxu0 %v170
    %202 = vmatpush1.bf16.msra.mxu0 %v169
    %203 = vmatprep.subr.bf16.mxu0 %v172
    %204 = vmatpush1.bf16.msra.mxu0 %v171
    %205 = vmatprep.subr.bf16.mxu0 %v174
    %206 = vmatpush1.bf16.msra.mxu0 %v173
    %207 = vmatprep.subr.bf16.mxu0 %v176
    %208 = vmatpush1.bf16.msra.mxu0 %v175
    %209 = vmatprep.subr.bf16.mxu0 %v178
    %210 = vmatpush1.bf16.msra.mxu0 %v177
    %211 = vmatprep.subr.bf16.mxu0 %v180
    %212 = vmatpush1.bf16.msra.mxu0 %v179
    %213 = vmatprep.subr.bf16.mxu0 %v182
    %214 = vmatpush1.bf16.msra.mxu0 %v181
    %215 = vmatprep.subr.bf16.mxu0 0
    %216 = vmatpush1.bf16.msra.mxu0 0
    %217 = vmatprep.subr.bf16.mxu0 0
    %218 = vmatpush1.bf16.msra.mxu0 0
    %219 = vmatprep.subr.bf16.mxu0 0
    %220 = vmatpush1.bf16.msra.mxu0 0
    %221 = vmatprep.subr.bf16.mxu0 0
    %222 = vmatpush1.bf16.msra.mxu0 0
    %223 = vmatprep.subr.bf16.mxu0 0
    %224 = vmatpush1.bf16.msra.mxu0 0
    %225 = vmatprep.subr.bf16.mxu0 0
    %226 = vmatpush1.bf16.msra.mxu0 0
    %227 = vmatprep.subr.bf16.mxu0 0
    %228 = vmatpush1.bf16.msra.mxu0 0
    %229 = vmatprep.subr.bf16.mxu0 0
    %230 = vmatpush1.bf16.msra.mxu0 0
    %231 = vmatprep.mubr.bf16.mxu0 0
    %232 = vmatmul.mubr.bf16.gmra.mrb[0].mxu0 %v117
    %v233 = vpop.f32.mrb[0].mxu0
    %v234 = vadd.f32 %v106, %v233
    %v235 = vpop.f32.mrb[0].mxu0
    %v236 = vadd.f32 %v110, %v235
    %v237 = vpop.f32.mrb[0].mxu0
    %v238 = vadd.f32 %v106, %v237
    %v239 = vpop.f32.mrb[0].mxu0
    %v240 = vadd.f32 %v110, %v239
    %241 = vdwg.mxu0
    %v242 = vmul.f32 %v234, 0.2
    %v243 = vmul.f32 %v236, 0.2
    %v244 = vmul.f32 %v238, 0.2
    %v245 = vmul.f32 %v240, 0.2
    %v246 = vmax.f32 %v234, %v242
    %v247 = vmax.f32 %v236, %v243
    %v248 = vmax.f32 %v238, %v244
    %v249 = vmax.f32 %v240, %v245
    %v250 = vpack.c.bf16 %v248, %v246
    %v251 = vpack.c.bf16 %v249, %v247
    %v252 = vld [vmem:[#allocation7] sm:$0xff]
    %v253 = vld [vmem:[#allocation7 + $0x8] sm:$0xff]
    %v254 = vld [vmem:[#allocation7 + $0x10] sm:$0xff]
    %v255 = vld [vmem:[#allocation7 + $0x18] sm:$0xff]
    %v256 = vld [vmem:[#allocation7 + $0x20] sm:$0xff]
    %v257 = vld [vmem:[#allocation7 + $0x28] sm:$0xff]
    %v258 = vld [vmem:[#allocation7 + $0x30] sm:$0xff]
    %v259 = vld [vmem:[#allocation7 + $0x38] sm:$0xff]
    %v260 = vld [vmem:[#allocation7 + $0x40] sm:$0xff]
    %v261 = vld [vmem:[#allocation7 + $0x48] sm:$0xff]
    %v262 = vld [vmem:[#allocation7 + $0x50] sm:$0xff]
    %v263 = vld [vmem:[#allocation7 + $0x58] sm:$0xff]
    %v264 = vld [vmem:[#allocation7 + $0x60] sm:$0xff]
    %v265 = vld [vmem:[#allocation7 + $0x68] sm:$0xff]
    %v266 = vld [vmem:[#allocation7 + $0x70] sm:$0xff]
    %v267 = vld [vmem:[#allocation7 + $0x78] sm:$0xff]
    %v268 = vld [vmem:[#allocation7 + $0x80] sm:$0xff]
    %v269 = vld [vmem:[#allocation7 + $0x88] sm:$0xff]
    %v270 = vld [vmem:[#allocation7 + $0x90] sm:$0xff]
    %v271 = vld [vmem:[#allocation7 + $0x98] sm:$0xff]
    %v272 = vld [vmem:[#allocation7 + $0xa0] sm:$0xff]
    %v273 = vld [vmem:[#allocation7 + $0xa8] sm:$0xff]
    %v274 = vld [vmem:[#allocation7 + $0xb0] sm:$0xff]
    %v275 = vld [vmem:[#allocation7 + $0xb8] sm:$0xff]
    %v276 = vld [vmem:[#allocation7 + $0xc0] sm:$0xff]
    %v277 = vld [vmem:[#allocation7 + $0xc8] sm:$0xff]
    %v278 = vld [vmem:[#allocation7 + $0xd0] sm:$0xff]
    %v279 = vld [vmem:[#allocation7 + $0xd8] sm:$0xff]
    %v280 = vld [vmem:[#allocation7 + $0xe0] sm:$0xff]
    %v281 = vld [vmem:[#allocation7 + $0xe8] sm:$0xff]
    %v282 = vld [vmem:[#allocation7 + $0xf0] sm:$0xff]
    %v283 = vld [vmem:[#allocation7 + $0xf8] sm:$0xff]
    %v284 = vld [vmem:[%s4] sm:$0x3]
    %v286 = vlaneseq
    %v287 = vshrl.u32 %v286, 7
    %v288 = vsub.s32 0, %v287
    %v289 = vrot.slane %v284, %v288
    %v290 = vlaneseq
    %v291 = vshrl.u32 %v290, 7
    %v292 = vsub.s32 1, %v291
    %v293 = vrot.slane %v284, %v292
    %v328 = vunpack.c.l.b16 %v252
    %v329 = vunpack.c.h.b16 %v252
    %v330 = vunpack.c.l.b16 %v253
    %v331 = vunpack.c.h.b16 %v253
    %v332 = vunpack.c.l.b16 %v254
    %v333 = vunpack.c.h.b16 %v254
    %v334 = vunpack.c.l.b16 %v255
    %v335 = vunpack.c.h.b16 %v255
    %v336 = vunpack.c.l.b16 %v256
    %v337 = vunpack.c.h.b16 %v256
    %v338 = vunpack.c.l.b16 %v257
    %v339 = vunpack.c.h.b16 %v257
    %v340 = vunpack.c.l.b16 %v258
    %v341 = vunpack.c.h.b16 %v258
    %v342 = vunpack.c.l.b16 %v259
    %v343 = vunpack.c.h.b16 %v259
    %v344 = vunpack.c.l.b16 %v260
    %v345 = vunpack.c.h.b16 %v260
    %v346 = vunpack.c.l.b16 %v261
    %v347 = vunpack.c.h.b16 %v261
    %v348 = vunpack.c.l.b16 %v262
    %v349 = vunpack.c.h.b16 %v262
    %v350 = vunpack.c.l.b16 %v263
    %v351 = vunpack.c.h.b16 %v263
    %v352 = vunpack.c.l.b16 %v264
    %v353 = vunpack.c.h.b16 %v264
    %v354 = vunpack.c.l.b16 %v265
    %v355 = vunpack.c.h.b16 %v265
    %v356 = vunpack.c.l.b16 %v266
    %v357 = vunpack.c.h.b16 %v266
    %v358 = vunpack.c.l.b16 %v267
    %v359 = vunpack.c.h.b16 %v267
    %v360 = vunpack.c.l.b16 %v268
    %v361 = vunpack.c.h.b16 %v268
    %v362 = vunpack.c.l.b16 %v269
    %v363 = vunpack.c.h.b16 %v269
    %v364 = vunpack.c.l.b16 %v270
    %v365 = vunpack.c.h.b16 %v270
    %v366 = vunpack.c.l.b16 %v271
    %v367 = vunpack.c.h.b16 %v271
    %v368 = vunpack.c.l.b16 %v272
    %v369 = vunpack.c.h.b16 %v272
    %v370 = vunpack.c.l.b16 %v273
    %v371 = vunpack.c.h.b16 %v273
    %v372 = vunpack.c.l.b16 %v274
    %v373 = vunpack.c.h.b16 %v274
    %v374 = vunpack.c.l.b16 %v275
    %v375 = vunpack.c.h.b16 %v275
    %v376 = vunpack.c.l.b16 %v276
    %v377 = vunpack.c.h.b16 %v276
    %v378 = vunpack.c.l.b16 %v277
    %v379 = vunpack.c.h.b16 %v277
    %v380 = vunpack.c.l.b16 %v278
    %v381 = vunpack.c.h.b16 %v278
    %v382 = vunpack.c.l.b16 %v279
    %v383 = vunpack.c.h.b16 %v279
    %v384 = vunpack.c.l.b16 %v280
    %v385 = vunpack.c.h.b16 %v280
    %v386 = vunpack.c.l.b16 %v281
    %v387 = vunpack.c.h.b16 %v281
    %v388 = vunpack.c.l.b16 %v282
    %v389 = vunpack.c.h.b16 %v282
    %v390 = vunpack.c.l.b16 %v283
    %v391 = vunpack.c.h.b16 %v283
    %v392 = vpack.c.b16 %v330, %v328
    %v393 = vpack.c.b16 %v331, %v329
    %v394 = vpack.c.b16 %v334, %v332
    %v395 = vpack.c.b16 %v335, %v333
    %v396 = vpack.c.b16 %v338, %v336
    %v397 = vpack.c.b16 %v339, %v337
    %v398 = vpack.c.b16 %v342, %v340
    %v399 = vpack.c.b16 %v343, %v341
    %v400 = vpack.c.b16 %v346, %v344
    %v401 = vpack.c.b16 %v347, %v345
    %v402 = vpack.c.b16 %v350, %v348
    %v403 = vpack.c.b16 %v351, %v349
    %v404 = vpack.c.b16 %v354, %v352
    %v405 = vpack.c.b16 %v355, %v353
    %v406 = vpack.c.b16 %v358, %v356
    %v407 = vpack.c.b16 %v359, %v357
    %v408 = vpack.c.b16 %v362, %v360
    %v409 = vpack.c.b16 %v363, %v361
    %v410 = vpack.c.b16 %v366, %v364
    %v411 = vpack.c.b16 %v367, %v365
    %v412 = vpack.c.b16 %v370, %v368
    %v413 = vpack.c.b16 %v371, %v369
    %v414 = vpack.c.b16 %v374, %v372
    %v415 = vpack.c.b16 %v375, %v373
    %v416 = vpack.c.b16 %v378, %v376
    %v417 = vpack.c.b16 %v379, %v377
    %v418 = vpack.c.b16 %v382, %v380
    %v419 = vpack.c.b16 %v383, %v381
    %v420 = vpack.c.b16 %v386, %v384
    %v421 = vpack.c.b16 %v387, %v385
    %v422 = vpack.c.b16 %v390, %v388
    %v423 = vpack.c.b16 %v391, %v389
    %456 = vmatprep.subr.bf16.mxu0 %v393
    %457 = vmatpush1.bf16.msra.mxu0 %v392
    %458 = vmatprep.subr.bf16.mxu0 %v395
    %459 = vmatpush1.bf16.msra.mxu0 %v394
    %460 = vmatprep.subr.bf16.mxu0 %v397
    %461 = vmatpush1.bf16.msra.mxu0 %v396
    %462 = vmatprep.subr.bf16.mxu0 %v399
    %463 = vmatpush1.bf16.msra.mxu0 %v398
    %464 = vmatprep.subr.bf16.mxu0 %v401
    %465 = vmatpush1.bf16.msra.mxu0 %v400
    %466 = vmatprep.subr.bf16.mxu0 %v403
    %467 = vmatpush1.bf16.msra.mxu0 %v402
    %468 = vmatprep.subr.bf16.mxu0 %v405
    %469 = vmatpush1.bf16.msra.mxu0 %v404
    %470 = vmatprep.subr.bf16.mxu0 %v407
    %471 = vmatpush1.bf16.msra.mxu0 %v406
    %472 = vmatprep.subr.bf16.mxu0 %v409
    %473 = vmatpush1.bf16.msra.mxu0 %v408
    %474 = vmatprep.subr.bf16.mxu0 %v411
    %475 = vmatpush1.bf16.msra.mxu0 %v410
    %476 = vmatprep.subr.bf16.mxu0 %v413
    %477 = vmatpush1.bf16.msra.mxu0 %v412
    %478 = vmatprep.subr.bf16.mxu0 %v415
    %479 = vmatpush1.bf16.msra.mxu0 %v414
    %480 = vmatprep.subr.bf16.mxu0 %v417
    %481 = vmatpush1.bf16.msra.mxu0 %v416
    %482 = vmatprep.subr.bf16.mxu0 %v419
    %483 = vmatpush1.bf16.msra.mxu0 %v418
    %484 = vmatprep.subr.bf16.mxu0 %v421
    %485 = vmatpush1.bf16.msra.mxu0 %v420
    %486 = vmatprep.subr.bf16.mxu0 %v423
    %487 = vmatpush1.bf16.msra.mxu0 %v422
    %488 = vmatprep.mubr.bf16.mxu0 %v251
    %489 = vmatmul.mubr.bf16.gmra.mrb[0].mxu0 %v250
    %v490 = vpop.f32.mrb[0].mxu0
    %v491 = vadd.f32 %v289, %v490
    %v492 = vpop.f32.mrb[0].mxu0
    %v493 = vadd.f32 %v293, %v492
    %v494 = vpop.f32.mrb[0].mxu0
    %v495 = vadd.f32 %v289, %v494
    %v496 = vpop.f32.mrb[0].mxu0
    %v497 = vadd.f32 %v293, %v496
    %498 = vdwg.mxu0
    %v499 = vmul.f32 %v491, 0.2
    %v500 = vmul.f32 %v493, 0.2
    %v501 = vmul.f32 %v495, 0.2
    %v502 = vmul.f32 %v497, 0.2
    %v503 = vmax.f32 %v491, %v499
    %v504 = vmax.f32 %v493, %v500
    %v505 = vmax.f32 %v495, %v501
    %v506 = vmax.f32 %v497, %v502
    %v507 = vpack.c.bf16 %v505, %v503
    %v508 = vpack.c.bf16 %v506, %v504
    %v509 = vld [vmem:[#allocation8] sm:$0xf]
    %v510 = vld [vmem:[#allocation8 + $0x4] sm:$0xf]
    %v511 = vld [vmem:[#allocation8 + $0x8] sm:$0xf]
    %v512 = vld [vmem:[#allocation8 + $0xc] sm:$0xf]
    %v513 = vld [vmem:[#allocation8 + $0x10] sm:$0xf]
    %v514 = vld [vmem:[#allocation8 + $0x14] sm:$0xf]
    %v515 = vld [vmem:[#allocation8 + $0x18] sm:$0xf]
    %v516 = vld [vmem:[#allocation8 + $0x1c] sm:$0xf]
    %v517 = vld [vmem:[#allocation8 + $0x20] sm:$0xf]
    %v518 = vld [vmem:[#allocation8 + $0x24] sm:$0xf]
    %v519 = vld [vmem:[#allocation8 + $0x28] sm:$0xf]
    %v520 = vld [vmem:[#allocation8 + $0x2c] sm:$0xf]
    %v521 = vld [vmem:[#allocation8 + $0x30] sm:$0xf]
    %v522 = vld [vmem:[#allocation8 + $0x34] sm:$0xf]
    %v523 = vld [vmem:[#allocation8 + $0x38] sm:$0xf]
    %v524 = vld [vmem:[#allocation8 + $0x3c] sm:$0xf]
    %v525 = vld [vmem:[#allocation8 + $0x40] sm:$0xf]
    %v526 = vld [vmem:[#allocation8 + $0x44] sm:$0xf]
    %v527 = vld [vmem:[#allocation8 + $0x48] sm:$0xf]
    %v528 = vld [vmem:[#allocation8 + $0x4c] sm:$0xf]
    %v529 = vld [vmem:[#allocation8 + $0x50] sm:$0xf]
    %v530 = vld [vmem:[#allocation8 + $0x54] sm:$0xf]
    %v531 = vld [vmem:[#allocation8 + $0x58] sm:$0xf]
    %v532 = vld [vmem:[#allocation8 + $0x5c] sm:$0xf]
    %v533 = vld [vmem:[#allocation8 + $0x60] sm:$0xf]
    %v534 = vld [vmem:[#allocation8 + $0x64] sm:$0xf]
    %v535 = vld [vmem:[#allocation8 + $0x68] sm:$0xf]
    %v536 = vld [vmem:[#allocation8 + $0x6c] sm:$0xf]
    %v537 = vld [vmem:[#allocation8 + $0x70] sm:$0xf]
    %v538 = vld [vmem:[#allocation8 + $0x74] sm:$0xf]
    %v539 = vld [vmem:[#allocation8 + $0x78] sm:$0xf]
    %v540 = vld [vmem:[#allocation8 + $0x7c] sm:$0xf]
    %v541 = vld [vmem:[%s6] sm:$0x1]
    %v543 = vlaneseq
    %v544 = vshrl.u32 %v543, 7
    %v545 = vsub.s32 0, %v544
    %v546 = vrot.slane %v541, %v545
    %v580 = vunpack.c.l.b16 %v509
    %v581 = vunpack.c.l.b16 %v510
    %v582 = vunpack.c.l.b16 %v511
    %v583 = vunpack.c.l.b16 %v512
    %v584 = vunpack.c.l.b16 %v513
    %v585 = vunpack.c.l.b16 %v514
    %v586 = vunpack.c.l.b16 %v515
    %v587 = vunpack.c.l.b16 %v516
    %v588 = vunpack.c.l.b16 %v517
    %v589 = vunpack.c.l.b16 %v518
    %v590 = vunpack.c.l.b16 %v519
    %v591 = vunpack.c.l.b16 %v520
    %v592 = vunpack.c.l.b16 %v521
    %v593 = vunpack.c.l.b16 %v522
    %v594 = vunpack.c.l.b16 %v523
    %v595 = vunpack.c.l.b16 %v524
    %v596 = vunpack.c.l.b16 %v525
    %v597 = vunpack.c.l.b16 %v526
    %v598 = vunpack.c.l.b16 %v527
    %v599 = vunpack.c.l.b16 %v528
    %v600 = vunpack.c.l.b16 %v529
    %v601 = vunpack.c.l.b16 %v530
    %v602 = vunpack.c.l.b16 %v531
    %v603 = vunpack.c.l.b16 %v532
    %v604 = vunpack.c.l.b16 %v533
    %v605 = vunpack.c.l.b16 %v534
    %v606 = vunpack.c.l.b16 %v535
    %v607 = vunpack.c.l.b16 %v536
    %v608 = vunpack.c.l.b16 %v537
    %v609 = vunpack.c.l.b16 %v538
    %v610 = vunpack.c.l.b16 %v539
    %v611 = vunpack.c.l.b16 %v540
    %v612 = vpack.c.b16 %v581, %v580
    %v613 = vpack.c.b16 %v583, %v582
    %v614 = vpack.c.b16 %v585, %v584
    %v615 = vpack.c.b16 %v587, %v586
    %v616 = vpack.c.b16 %v589, %v588
    %v617 = vpack.c.b16 %v591, %v590
    %v618 = vpack.c.b16 %v593, %v592
    %v619 = vpack.c.b16 %v595, %v594
    %v620 = vpack.c.b16 %v597, %v596
    %v621 = vpack.c.b16 %v599, %v598
    %v622 = vpack.c.b16 %v601, %v600
    %v623 = vpack.c.b16 %v603, %v602
    %v624 = vpack.c.b16 %v605, %v604
    %v625 = vpack.c.b16 %v607, %v606
    %v626 = vpack.c.b16 %v609, %v608
    %v627 = vpack.c.b16 %v611, %v610
    %644 = vmatprep.subr.bf16.mxu0 0
    %645 = vmatpush1.bf16.msra.mxu0 %v612
    %646 = vmatprep.subr.bf16.mxu0 0
    %647 = vmatpush1.bf16.msra.mxu0 %v613
    %648 = vmatprep.subr.bf16.mxu0 0
    %649 = vmatpush1.bf16.msra.mxu0 %v614
    %650 = vmatprep.subr.bf16.mxu0 0
    %651 = vmatpush1.bf16.msra.mxu0 %v615
    %652 = vmatprep.subr.bf16.mxu0 0
    %653 = vmatpush1.bf16.msra.mxu0 %v616
    %654 = vmatprep.subr.bf16.mxu0 0
    %655 = vmatpush1.bf16.msra.mxu0 %v617
    %656 = vmatprep.subr.bf16.mxu0 0
    %657 = vmatpush1.bf16.msra.mxu0 %v618
    %658 = vmatprep.subr.bf16.mxu0 0
    %659 = vmatpush1.bf16.msra.mxu0 %v619
    %660 = vmatprep.subr.bf16.mxu0 0
    %661 = vmatpush1.bf16.msra.mxu0 %v620
    %662 = vmatprep.subr.bf16.mxu0 0
    %663 = vmatpush1.bf16.msra.mxu0 %v621
    %664 = vmatprep.subr.bf16.mxu0 0
    %665 = vmatpush1.bf16.msra.mxu0 %v622
    %666 = vmatprep.subr.bf16.mxu0 0
    %667 = vmatpush1.bf16.msra.mxu0 %v623
    %668 = vmatprep.subr.bf16.mxu0 0
    %669 = vmatpush1.bf16.msra.mxu0 %v624
    %670 = vmatprep.subr.bf16.mxu0 0
    %671 = vmatpush1.bf16.msra.mxu0 %v625
    %672 = vmatprep.subr.bf16.mxu0 0
    %673 = vmatpush1.bf16.msra.mxu0 %v626
    %674 = vmatprep.subr.bf16.mxu0 0
    %675 = vmatpush1.bf16.msra.mxu0 %v627
    %676 = vmatprep.mubr.bf16.mxu0 %v508
    %677 = vmatmul.mubr.bf16.gmra.mrb[0].mxu0 %v507
    %v678 = vpop.f32.mrb[0].mxu0
    %v679 = vadd.f32 %v546, %v678
    %v680 = vpop.f32.mrb[0].mxu0
    %v681 = vpop.f32.mrb[0].mxu0
    %v682 = vadd.f32 %v546, %v681
    %v683 = vpop.f32.mrb[0].mxu0
    %684 = vdwg.mxu0
    %685 = vst [vmem:[#allocation10] sm:$0xff] %v679
    %686 = vst [vmem:[#allocation10 + $0x8] sm:$0xff] %v682
    // Predicated region
    $region46: #{tpu_custom_call.1} parent=1 // pred_check
      _
    $region47: #{tpu_custom_call.1} parent=1 // pred_check_branch
      %688 = sbr.rel (0) target = $region49
    $region48: #{tpu_custom_call.1} parent=1 // pred_region
      %s690 = ssub.s32 256, 256
      %691 = vsyncadd [#allocation4], %s690
      %s692 = sshll.u32 [#allocation10], 4
      %s693 = int_to_ptr.vmem [resolvable:$true] %s692
      %698 = dma.vmem_to_hbm [thread:$0]  %s693, 256, %s7, [#allocation4], 128, 128, 8
    $region49: #{tpu_custom_call.1} parent=1 // pred_fallthru
      _
    // Predicated region
    $region50: #{tpu_custom_call.1} parent=1 // pred_check
      _
    $region51: #{tpu_custom_call.1} parent=1 // pred_check_branch
      %700 = sbr.rel (0) target = $region53
    $region52: #{tpu_custom_call.1} parent=1 // pred_region
      %701 = dma.done [#allocation4], 256
    $region53: #{tpu_custom_call.1} parent=1 // pred_fallthru
      _
    %702 = vsyncpa [#allocation3], 1
    %703 = vsyncpa [#allocation6], 1
    %704 = vsyncpa [#allocation9], 1
    %705 = vsyncpa [#allocation4], 1

</llo_original>
